<compile_context>
chip_gen: v7x
topology: tpu7x:2x2x1
jax: 0.10.0
libtpu: 0.0.40
codegen_flags: <defaults>
</compile_context>

<pallas_src>
import jax
import jax.numpy as jnp
from jax import lax
from jax.experimental import pallas as pl
from jax.experimental.pallas import tpu as pltpu

_ROWS, _LANES = 8, 128          # one f32 vreg, lane-dense output
_BATCH = _ROWS * _LANES         # 1024 draws per launch


def _randy_kernel(seed_ref, out_ref):
    # seed_ref: (1,) int32 in SMEM.   out_ref: (8, 128) float32 in VMEM.
    seed = seed_ref[0].astype(jnp.uint32)

    # Distinct 32-bit counter per output element: seed * 1024 + flat_index.
    row = lax.broadcasted_iota(jnp.uint32, (_ROWS, _LANES), 0)
    col = lax.broadcasted_iota(jnp.uint32, (_ROWS, _LANES), 1)
    x = seed * jnp.uint32(_BATCH) + row * jnp.uint32(_LANES) + col

    # splitmix32-style avalanche mix (wraps mod 2^32) — pure VALU, f32/u32 only.
    x = x + jnp.uint32(0x9E3779B9)
    x = (x ^ (x >> jnp.uint32(16))) * jnp.uint32(0x85EBCA6B)
    x = (x ^ (x >> jnp.uint32(13))) * jnp.uint32(0xC2B2AE35)
    x = x ^ (x >> jnp.uint32(16))

    # Mantissa bit-trick: top 23 bits -> float32 in [1, 2), subtract 1 -> [0, 1).
    mant = (x >> jnp.uint32(9)) | jnp.uint32(0x3F800000)
    out_ref[...] = lax.bitcast_convert_type(mant, jnp.float32) - jnp.float32(1.0)


# Built once at import time; jitted so repeated calls hit the XLA cache.
_randy_batch = jax.jit(
    pl.pallas_call(
        _randy_kernel,
        out_shape=jax.ShapeDtypeStruct((_ROWS, _LANES), jnp.float32),
        in_specs=[pl.BlockSpec(memory_space=pltpu.MemorySpace.SMEM)],
        out_specs=pl.BlockSpec(memory_space=pltpu.MemorySpace.VMEM),
    )
)


class Randy:
    """Pallas equivalent of the PyTorch Randy module.

    forward(input_minute) ignores its input and returns a fresh (1,) float32
    uniform in [0, 1).  Draws are generated 1024 at a time on-device and
    dispensed one per call; a new seed (refill counter) is sent only when the
    batch is exhausted, mimicking random.random()'s "fresh value every call"
    behaviour without a per-call H2D transfer or kernel rebuild.
    """

    def __init__(self, seed: int = 0):
        self.type = "classifier"
        self._counter = int(seed) & 0x7FFFFFFF
        self._cache = None
        self._pos = _BATCH  # force a refill on first call

    def _refill(self):
        seed_arr = jnp.asarray([self._counter], dtype=jnp.int32)
        self._cache = _randy_batch(seed_arr).reshape(_BATCH)
        self._counter = (self._counter + 1) & 0x7FFFFFFF
        self._pos = 0

    def forward(self, input_minute):
        del input_minute  # unused by the reference forward
        if self._pos >= _BATCH:
            self._refill()
        r = self._cache[self._pos : self._pos + 1]
        self._pos += 1
        return r

    __call__ = forward


def init_randy_params(key):
    """Deterministic init of the (unused-in-forward) linear layers.

    Shapes follow nn.Linear(in, out): weight (out, in), bias (out,). They are
    NOT consumed by forward, matching the PyTorch module.
    """
    k1, k2, k3, k4, k5, k6 = jax.random.split(key, 6)

    def _linear(kw, kb, fan_in, fan_out):
        bound = 1.0 / jnp.sqrt(jnp.float32(fan_in))
        w = jax.random.uniform(kw, (fan_out, fan_in), jnp.float32, -bound, bound)
        b = jax.random.uniform(kb, (fan_out,), jnp.float32, -bound, bound)
        return w, b

    return {
        "input_layer": _linear(k1, k2, 8, 25),
        "hidden_layer": _linear(k3, k4, 25, 10),
        "output_layer": _linear(k5, k6, 10, 1),
    }


if __name__ == "__main__":
    key = jax.random.PRNGKey(0)
    k_param, k_input = jax.random.split(key)

    # Parameters exist (deterministically initialized) but, like the PyTorch
    # module, are not consumed by the forward pass.
    params = init_randy_params(k_param)

    # Example input consistent with nn.Linear(8, 25): (batch=2, features=8).
    input_minute = jax.random.normal(k_input, (2, 8), dtype=jnp.float32)

    model = Randy(seed=0)

    out = jax.block_until_ready(model(input_minute))
    assert out.shape == (1,), out.shape
    assert out.dtype == jnp.float32, out.dtype
    assert 0.0 <= float(out[0]) < 1.0, float(out[0])

    # The whole cached batch must lie in [0, 1).
    cache = jax.block_until_ready(model._cache)
    assert float(jnp.min(cache)) >= 0.0
    assert float(jnp.max(cache)) < 1.0

    # Subsequent calls dispense further draws with no new kernel launch.
    out2 = jax.block_until_ready(model(input_minute))
    out3 = jax.block_until_ready(model(input_minute))
    assert out2.shape == (1,) and 0.0 <= float(out2[0]) < 1.0
    assert out3.shape == (1,) and 0.0 <= float(out3[0]) < 1.0

    print("KERNEL_OK")
</pallas_src>

<mosaic_0001>
module attributes {stable_mosaic.version = 11 : i64} {
  func.func @_randy_kernel(%arg0: memref<1xi32, #tpu.memory_space<smem>>, %arg1: memref<8x128xf32, #tpu.memory_space<vmem>>) attributes {dimension_semantics = [], scalar_prefetch = 0 : i64, scratch_operands = 0 : i64, tpu.core_type = #tpu.core_type<tc>} {
    %c0 = arith.constant 0 : index
    %0 = memref.load %arg0[%c0] : memref<1xi32, #tpu.memory_space<smem>>
    %1 = tpu.iota {dimensions = array<i32: 0>} : vector<8x128xi32>
    %2 = tpu.iota {dimensions = array<i32: 1>} : vector<8x128xi32>
    %c1024_i32 = arith.constant 1024 : i32
    %3 = arith.muli %0, %c1024_i32 : i32
    %c128_i32 = arith.constant 128 : i32
    %4 = vector.broadcast %c128_i32 : i32 to vector<8x128xi32>
    %5 = arith.muli %1, %4 : vector<8x128xi32>
    %6 = vector.broadcast %3 : i32 to vector<8x128xi32>
    %7 = arith.addi %6, %5 : vector<8x128xi32>
    %8 = arith.addi %7, %2 : vector<8x128xi32>
    %c-1640531527_i32 = arith.constant -1640531527 : i32
    %9 = vector.broadcast %c-1640531527_i32 : i32 to vector<8x128xi32>
    %10 = arith.addi %8, %9 : vector<8x128xi32>
    %c16_i32 = arith.constant 16 : i32
    %11 = vector.broadcast %c16_i32 : i32 to vector<8x128xi32>
    %12 = arith.shrui %10, %11 : vector<8x128xi32>
    %13 = arith.xori %10, %12 : vector<8x128xi32>
    %c-2048144789_i32 = arith.constant -2048144789 : i32
    %14 = vector.broadcast %c-2048144789_i32 : i32 to vector<8x128xi32>
    %15 = arith.muli %13, %14 : vector<8x128xi32>
    %c13_i32 = arith.constant 13 : i32
    %16 = vector.broadcast %c13_i32 : i32 to vector<8x128xi32>
    %17 = arith.shrui %15, %16 : vector<8x128xi32>
    %18 = arith.xori %15, %17 : vector<8x128xi32>
    %c-1028477387_i32 = arith.constant -1028477387 : i32
    %19 = vector.broadcast %c-1028477387_i32 : i32 to vector<8x128xi32>
    %20 = arith.muli %18, %19 : vector<8x128xi32>
    %c16_i32_0 = arith.constant 16 : i32
    %21 = vector.broadcast %c16_i32_0 : i32 to vector<8x128xi32>
    %22 = arith.shrui %20, %21 : vector<8x128xi32>
    %23 = arith.xori %20, %22 : vector<8x128xi32>
    %c9_i32 = arith.constant 9 : i32
    %24 = vector.broadcast %c9_i32 : i32 to vector<8x128xi32>
    %25 = arith.shrui %23, %24 : vector<8x128xi32>
    %c1065353216_i32 = arith.constant 1065353216 : i32
    %26 = vector.broadcast %c1065353216_i32 : i32 to vector<8x128xi32>
    %27 = arith.ori %25, %26 : vector<8x128xi32>
    %28 = tpu.bitcast %27 : vector<8x128xi32> -> vector<8x128xf32>
    %cst = arith.constant 1.000000e+00 : f32
    %29 = vector.broadcast %cst : f32 to vector<8x128xf32>
    %30 = arith.subf %28, %29 : vector<8x128xf32>
    %c0_1 = arith.constant 0 : index
    %c0_2 = arith.constant 0 : index
    %31 = vector.load %arg1[%c0_1, %c0_2] : memref<8x128xf32, #tpu.memory_space<vmem>>, vector<8x128xf32>
    tpu.vector_store %arg1[%c0_1, %c0_2], %30 {strides = array<i32>} : memref<8x128xf32, #tpu.memory_space<vmem>>, vector<8x128xf32>,
    return
  }
}

</mosaic_0001>

<llo_original>
// kernel: tpu_custom_call.1
$region0: #{tpu_custom_call.1}
  #allocation0 [shape = 'u32[]', space=smem, size = 0x4, offset = 0x4, fixed_abs, tag = 'smem constant byte address 0x4 - core index']
  #allocation1 [shape = 'u32[144,128]{1,0:T(1,128)}', space=vmem, size = 0x12000, scoped, tag = 'internal scratch']
  #allocation2 [shape = 's32[1]{0:T(128)S(6)}', space=smem, size = 0x200, scoped, tag = 'scoped memory for tpu_custom_call.1']
  %s0 = inlined_call_operand.<no memory space> [shape: s32[1], index: 0, kind: input, shape index: {}]
  %s1 = inlined_call_operand.hbm [shape: f32[8,128], index: 1, kind: output, shape index: {}]
  %s2 = sld [smem:[#allocation0]]
  $region14: #{tpu_custom_call.1} parent=0
    _
  %s4 = ssub.s32 1, %s2
  %s5 = scalar_select 0, %s4, %s2
  %6 = sst [smem:[#allocation2]] %s0
  $region1: #{tpu_custom_call.1} parent=0
    #allocation3 [shape = 'u8[4096]{0}', space=vmem, size = 0x1000, scoped, tag = 'output window, operand 0, single buffered']
    #allocation4 [shape = 's32[1]{0}', space=sflag, size = 0x4, scoped, tag = 'scoped memory for tpu_custom_call.1']
    %7 = vsyncpa [#allocation4], 0
    // Predicated region
    $region2: #{tpu_custom_call.1} parent=1 // pred_check
      _
    $region3: #{tpu_custom_call.1} parent=1 // pred_check_branch
      %9 = sbr.rel (0) target = $region5
    $region4: #{tpu_custom_call.1} parent=1 // pred_region
      _
    $region5: #{tpu_custom_call.1} parent=1 // pred_fallthru
      _
    %s10 = sld [smem:[#allocation2]]
    %v11 = vlaneseq
    %v12 = vshrl.u32 %v11, 7
    %v13 = vlaneseq
    %v14 = vand.u32 %v13, 127
    %s15 = smul.u32 %s10, 1024
    %v16 = vmul.u32 %v12, 128
    %v17 = vstv %s15
    %v18 = vadd.s32 %v17, %v16
    %v19 = vadd.s32 %v18, %v14
    %v20 = vadd.s32 %v19, 2654435769
    %v21 = vshrl.u32 %v20, 16
    %v22 = vxor.u32 %v20, %v21
    %v23 = vmul.u32 %v22, 2246822507
    %v24 = vshrl.u32 %v23, 13
    %v25 = vxor.u32 %v23, %v24
    %v26 = vmul.u32 %v25, 3266489909
    %v27 = vshrl.u32 %v26, 16
    %v28 = vxor.u32 %v26, %v27
    %v29 = vshrl.u32 %v28, 9
    %v30 = vor.u32 %v29, 1065353216
    %v32 = vsub.f32 %v30, 1.0
    %33 = vst [vmem:[#allocation3] sm:$0xff] %v32
    // Predicated region
    $region6: #{tpu_custom_call.1} parent=1 // pred_check
      _
    $region7: #{tpu_custom_call.1} parent=1 // pred_check_branch
      %35 = sbr.rel (0) target = $region9
    $region8: #{tpu_custom_call.1} parent=1 // pred_region
      %s37 = ssub.s32 128, 128
      %38 = vsyncadd [#allocation4], %s37
      %s40 = sshll.u32 [#allocation3], 4
      %s41 = int_to_ptr.vmem [resolvable:$true] %s40
      %43 = dma.vmem_to_hbm [thread:$0]  %s41, 128, %s1, [#allocation4]
    $region9: #{tpu_custom_call.1} parent=1 // pred_fallthru
      _
    // Predicated region
    $region10: #{tpu_custom_call.1} parent=1 // pred_check
      _
    $region11: #{tpu_custom_call.1} parent=1 // pred_check_branch
      %45 = sbr.rel (0) target = $region13
    $region12: #{tpu_custom_call.1} parent=1 // pred_region
      %46 = dma.done [#allocation4], 128
    $region13: #{tpu_custom_call.1} parent=1 // pred_fallthru
      _
    %47 = vsyncpa [#allocation4], 1

</llo_original>
